<compile_context>
chip_gen: v6e
topology: v6e:2x2x1
jax: 0.10.0
libtpu: 0.0.40
codegen_flags: <defaults>
</compile_context>

<pallas_src>
import functools

import jax
import jax.numpy as jnp
from jax.experimental import pallas as pl
from jax.experimental.pallas import tpu as pltpu

EPS = 1e-5
FOLD = 8          # input positions folded per row -> 4 layer-1 and 2 layer-2 outputs per row
NSEG1 = 5         # layer-1 activation slab segments: [y(4r-1), y(4r), y(4r+1), y(4r+2), y(4r+3)]
NSEG2 = 2         # layer-2 output slab segments:     [z(2r), z(2r+1)]


# ----------------------------------------------------------------------------
# Fused kernel (one length-chunk of one batch element per grid step).
#   x_ref    : (TR, 8*C_in)        folded channels-last input rows of this chunk
#   halo_ref : (1, 8*C_in)         folded row just before this chunk (zeros for chunk 0)
#   w1_ref   : (16*C_in, 5*C1)     fused + per-segment-centered layer-1 weights
#   a1_ref   : (5*C1, 5*C1)        block-diagonal averaging matrix (1/C1 blocks)
#   w2_ref   : (5*C1, 2*C2)        fused + per-segment-centered layer-2 weights
#   a2_ref   : (2*C2, 2*C2)        block-diagonal averaging matrix (1/C2 blocks)
#   ep1_ref  : (3, 5*C1)           [centered bias1, gamma1, beta1], tiled per segment
#   ep2_ref  : (3, 2*C2)           [centered bias2, gamma2, beta2], tiled per segment
#   o_ref    : (TR, 2*C2)          lane-dense output, row r = [feat(2r) ; feat(2r+1)]
# ----------------------------------------------------------------------------
def _encoder_kernel(x_ref, halo_ref, w1_ref, a1_ref, w2_ref, a2_ref, ep1_ref, ep2_ref,
                    o_ref, *, eps, c1, nc):
    # previous folded row for every row of this chunk (row 0 <- per-chunk halo row)
    x_cur = x_ref[...]
    x_prev = pltpu.roll(x_cur, shift=1, axis=0)
    row0 = jax.lax.broadcasted_iota(jnp.int32, x_cur.shape, 0) == 0
    x_prev = jnp.where(row0, halo_ref[...], x_prev)

    # K = 2 * FOLD * C_in contraction; one matmul produces the whole layer-1 slab.
    u = jnp.concatenate([x_prev, x_cur], axis=1)

    # ---- layer 1: centered pre-activation slab -> LayerNorm -> ReLU (all lane-dense) ----
    b1 = ep1_ref[0:1, :]
    g1 = ep1_ref[1:2, :]
    be1 = ep1_ref[2:3, :]
    y1 = jnp.dot(u, w1_ref[...], preferred_element_type=jnp.float32) + b1      # centered
    var1 = jnp.dot(y1 * y1, a1_ref[...], preferred_element_type=jnp.float32)   # per-segment
    h = jnp.maximum(y1 * jax.lax.rsqrt(var1 + eps) * g1 + be1, 0.0)

    # h(4r-1) at the global first row of a batch element is layer-2 left zero padding.
    is_first_chunk = (pl.program_id(0) % nc) == 0
    rows = jax.lax.broadcasted_iota(jnp.int32, h.shape, 0)
    lanes = jax.lax.broadcasted_iota(jnp.int32, h.shape, 1)
    pad_mask = jnp.logical_and(jnp.logical_and(rows == 0, lanes < c1), is_first_chunk)
    h = jnp.where(pad_mask, 0.0, h)

    # ---- layer 2: one matmul writes [z(2r) | z(2r+1)] in the lane-dense output layout ----
    b2 = ep2_ref[0:1, :]
    g2 = ep2_ref[1:2, :]
    be2 = ep2_ref[2:3, :]
    y2 = jnp.dot(h, w2_ref[...], preferred_element_type=jnp.float32) + b2      # centered
    var2 = jnp.dot(y2 * y2, a2_ref[...], preferred_element_type=jnp.float32)
    out = jnp.maximum(y2 * jax.lax.rsqrt(var2 + eps) * g2 + be2, 0.0)

    o_ref[...] = out.astype(o_ref.dtype)


# ----------------------------------------------------------------------------
# Host-side (one-time) weight fusion.
# ----------------------------------------------------------------------------
def _center_cols(w, seg):
    """Center each seg-wide column group: equivalent to W @ blockdiag(I - J/seg)."""
    k_in, cols = w.shape
    wr = w.reshape(k_in, cols // seg, seg)
    return (wr - wr.mean(axis=-1, keepdims=True)).reshape(k_in, cols)


def _build_w1(w1):
    """Fused layer-1 weight: (2*FOLD*C_in, 5*C1); input = [prev folded row || cur folded row].

    Column segment s corresponds to layer-1 output y(4r + s - 1); stride 2, pad 1, K=3.
    """
    c1, cin, k = w1.shape
    assert k == 3
    taps = [jnp.transpose(w1[:, :, t]) for t in range(k)]          # (C_in, C1) each
    wf = jnp.zeros((2 * FOLD * cin, NSEG1 * c1), jnp.float32)
    for s in range(NSEG1):
        j = s - 1                                                  # output index 4r + j
        for t in range(k):
            rel = 2 * j - 1 + t                                    # input position - 8r
            row0 = (FOLD + rel) * cin                              # prev block if rel<0
            wf = wf.at[row0:row0 + cin, s * c1:(s + 1) * c1].set(taps[t])
    return wf


def _build_w2(w2):
    """Fused layer-2 weight: (5*C1, 2*C2); output = [z(2r) | z(2r+1)]."""
    c2, c1, k = w2.shape
    assert k == 3
    wf = jnp.zeros((NSEG1 * c1, NSEG2 * c2), jnp.float32)
    for q in range(NSEG2):                                         # output z(2r + q)
        for t in range(k):
            s = 2 * q + t                                          # tap h(4r + 2q - 1 + t)
            wf = wf.at[s * c1:(s + 1) * c1, q * c2:(q + 1) * c2].set(jnp.transpose(w2[:, :, t]))
    return wf


def _avg_matrix(n_seg, seg):
    """Block-diagonal averaging matrix: (n_seg*seg, n_seg*seg) with 1/seg blocks."""
    return jnp.kron(jnp.eye(n_seg, dtype=jnp.float32),
                    jnp.ones((seg, seg), jnp.float32) / seg)


def _epilogue_params(b, g, be, n_seg):
    """[centered bias, gamma, beta] tiled per slab segment, f32 (Fp32LayerNorm)."""
    return jnp.stack([jnp.tile(b - jnp.mean(b), n_seg),
                      jnp.tile(g, n_seg),
                      jnp.tile(be, n_seg)]).astype(jnp.float32)


# ----------------------------------------------------------------------------
# Encoder forward: returns {'features': (B, L/4, C2)}  (already NLC -> no final transpose)
# ----------------------------------------------------------------------------
def encoder_forward(x, params, *, eps=EPS, chunk_rows=512, out_dtype=None):
    assert len(params) == 2, "fused kernel is specialized to the 2-layer synthetic config"
    (w1, b1, g1, be1), (w2, b2, g2, be2) = params
    b_sz, c_in, length = x.shape
    c1 = w1.shape[0]
    c2 = w2.shape[0]
    assert w1.shape == (c1, c_in, 3) and w2.shape == (c2, c1, 3)
    assert length % FOLD == 0, "sequence length must be divisible by 8 for this config"
    lr = length // FOLD                       # folded rows per batch element
    out_dtype = x.dtype if out_dtype is None else out_dtype

    # Chunk the folded-length axis: largest divisor of lr that is <= chunk_rows.
    tr = 1
    for d in range(1, min(lr, chunk_rows) + 1):
        if lr % d == 0:
            tr = d
    nc = lr // tr

    # NCL -> channels-last, fold FOLD positions per row (contiguous reshape of the NLC view).
    xf = jnp.transpose(x, (0, 2, 1)).reshape(b_sz, lr, FOLD * c_in)
    # Per-chunk halo row = folded row just before the chunk (zeros before the first chunk).
    zero_row = jnp.zeros((b_sz, 1, FOLD * c_in), xf.dtype)
    if nc > 1:
        prev_rows = xf[:, tr - 1::tr, :][:, :nc - 1, :]
        halo = jnp.concatenate([zero_row, prev_rows], axis=1)
    else:
        halo = zero_row
    xf = xf.reshape(b_sz * nc, tr, FOLD * c_in)
    halo = halo.reshape(b_sz * nc, 1, FOLD * c_in)

    # One-time fused, per-segment-centered weights + LN epilogue params + averaging matrices.
    w1f = _center_cols(_build_w1(w1), c1)                          # (16*C_in, 5*C1)
    w2f = _center_cols(_build_w2(w2), c2)                          # (5*C1, 2*C2)
    a1m = _avg_matrix(NSEG1, c1)                                   # (5*C1, 5*C1)
    a2m = _avg_matrix(NSEG2, c2)                                   # (2*C2, 2*C2)
    ep1 = _epilogue_params(b1, g1, be1, NSEG1)                     # (3, 5*C1)
    ep2 = _epilogue_params(b2, g2, be2, NSEG2)                     # (3, 2*C2)

    rows_total = b_sz * lr
    flops = int(2 * rows_total * ((2 * FOLD * c_in) * (NSEG1 * c1)
                                  + (NSEG1 * c1) * (NSEG1 * c1)
                                  + (NSEG1 * c1) * (NSEG2 * c2)
                                  + (NSEG2 * c2) * (NSEG2 * c2)))
    trans = int(rows_total * (NSEG1 * c1 + NSEG2 * c2))
    bytes_acc = int(4 * (xf.size + halo.size + w1f.size + w2f.size + a1m.size + a2m.size
                         + ep1.size + ep2.size)
                    + rows_total * NSEG2 * c2 * jnp.dtype(out_dtype).itemsize)

    kernel = functools.partial(_encoder_kernel, eps=eps, c1=c1, nc=nc)
    out = pl.pallas_call(
        kernel,
        out_shape=jax.ShapeDtypeStruct((b_sz * nc, tr, NSEG2 * c2), out_dtype),
        grid=(b_sz * nc,),
        in_specs=[
            pl.BlockSpec((None, tr, FOLD * c_in), lambda i: (i, 0, 0)),
            pl.BlockSpec((None, 1, FOLD * c_in), lambda i: (i, 0, 0)),
            pl.BlockSpec((2 * FOLD * c_in, NSEG1 * c1), lambda i: (0, 0)),
            pl.BlockSpec((NSEG1 * c1, NSEG1 * c1), lambda i: (0, 0)),
            pl.BlockSpec((NSEG1 * c1, NSEG2 * c2), lambda i: (0, 0)),
            pl.BlockSpec((NSEG2 * c2, NSEG2 * c2), lambda i: (0, 0)),
            pl.BlockSpec((3, NSEG1 * c1), lambda i: (0, 0)),
            pl.BlockSpec((3, NSEG2 * c2), lambda i: (0, 0)),
        ],
        out_specs=pl.BlockSpec((None, tr, NSEG2 * c2), lambda i: (i, 0, 0)),
        compiler_params=pltpu.CompilerParams(
            dimension_semantics=("parallel",),
            vmem_limit_bytes=32 * 1024 * 1024),
        cost_estimate=pl.CostEstimate(flops=flops, transcendentals=trans,
                                      bytes_accessed=bytes_acc),
    )(xf, halo, w1f, a1m, w2f, a2m, ep1, ep2)

    # (B*NC, TR, 128) row r = [pos 2r ; pos 2r+1] -> (B, L/4, C2); contiguous (free) reshape.
    features = out.reshape(b_sz, length // 4, c2)
    return {"features": features}


# ----------------------------------------------------------------------------
# Pure-JAX reference (im2col, matches PyTorch Conv1d + Fp32LayerNorm + ReLU semantics).
# ----------------------------------------------------------------------------
def _reference_forward(x, params, cfgs, eps=EPS):
    for (w, b, g, be), (s, p, d) in zip(params, cfgs):
        bsz, c_in, length = x.shape
        c_out, _, k = w.shape
        l_out = (length + 2 * p - d * (k - 1) - 1) // s + 1
        xp = jnp.pad(x, ((0, 0), (0, 0), (p, p)))
        idx = (jnp.arange(l_out) * s)[:, None] + jnp.arange(k) * d
        patches = xp[:, :, idx].transpose(0, 2, 1, 3).reshape(bsz * l_out, c_in * k)
        y = patches @ w.reshape(c_out, c_in * k).T + b
        m = y.mean(-1, keepdims=True)
        v = ((y - m) ** 2).mean(-1, keepdims=True)
        y = (y - m) * jax.lax.rsqrt(v + eps) * g + be
        y = jnp.maximum(y, 0.0).reshape(bsz, l_out, c_out)
        x = y.transpose(0, 2, 1)
    return x.transpose(0, 2, 1)


if __name__ == "__main__":
    # Synthetic encoder config
    num_inputs = [4, 32]
    embedding_sizes = [32, 64]
    kernel_sizes = [3, 3]
    strides = [2, 2]
    dilations = [1, 1]
    paddings = [1, 1]

    key = jax.random.PRNGKey(0)
    B, C_in, L = 2, 4, 64
    key, xk = jax.random.split(key)
    x = jax.random.normal(xk, (B, C_in, L), dtype=jnp.float32)   # NCL, like PyTorch

    # Non-trivial bias / gamma / beta so broadcasting bugs would be caught.
    params = []
    for cin, cout, k in zip(num_inputs, embedding_sizes, kernel_sizes):
        key, wk, bk, gk, b2k = jax.random.split(key, 5)
        w = 0.05 * jax.random.normal(wk, (cout, cin, k), dtype=jnp.float32)
        b = 0.1 * jax.random.normal(bk, (cout,), dtype=jnp.float32)
        g = 1.0 + 0.1 * jax.random.normal(gk, (cout,), dtype=jnp.float32)
        be = 0.1 * jax.random.normal(b2k, (cout,), dtype=jnp.float32)
        params.append((w, b, g, be))

    fwd = jax.jit(lambda inp: encoder_forward(inp, params)["features"])
    feats = jax.block_until_ready(fwd(x))

    # Expected: L = 64 -> 32 -> 16, C = 64 ; features shape (B, 16, 64)
    assert feats.shape == (B, 16, 64), feats.shape
    assert bool(jnp.all(jnp.isfinite(feats)))

    ref = _reference_forward(x, params, list(zip(strides, paddings, dilations)))
    max_err = float(jnp.max(jnp.abs(feats - ref)))
    assert max_err < 1e-4, f"max abs err vs reference: {max_err}"

    print("KERNEL_OK")
</pallas_src>

<mosaic_0001>
module attributes {stable_mosaic.version = 11 : i64} {
  func.func @_encoder_kernel(%arg0: i32, %arg1: memref<1x8x32xf32, #tpu.memory_space<vmem>>, %arg2: memref<1x1x32xf32, #tpu.memory_space<vmem>>, %arg3: memref<64x160xf32, #tpu.memory_space<vmem>>, %arg4: memref<160x160xf32, #tpu.memory_space<vmem>>, %arg5: memref<160x128xf32, #tpu.memory_space<vmem>>, %arg6: memref<128x128xf32, #tpu.memory_space<vmem>>, %arg7: memref<3x160xf32, #tpu.memory_space<vmem>>, %arg8: memref<3x128xf32, #tpu.memory_space<vmem>>, %arg9: memref<1x8x128xf32, #tpu.memory_space<vmem>>) attributes {dimension_semantics = [#tpu.dimension_semantics<parallel>], iteration_bounds = array<i64: 2>, scalar_prefetch = 0 : i64, scratch_operands = 0 : i64, tpu.core_type = #tpu.core_type<tc>, window_params = [{transform_indices = @transform_0, window_bounds = array<i64: 1, 8, 32>}, {transform_indices = @transform_1, window_bounds = array<i64: 1, 1, 32>}, {pipeline_mode = #tpu.pipeline_mode<synchronous>, transform_indices = @transform_2, window_bounds = array<i64: 64, 160>}, {pipeline_mode = #tpu.pipeline_mode<synchronous>, transform_indices = @transform_3, window_bounds = array<i64: 160, 160>}, {pipeline_mode = #tpu.pipeline_mode<synchronous>, transform_indices = @transform_4, window_bounds = array<i64: 160, 128>}, {pipeline_mode = #tpu.pipeline_mode<synchronous>, transform_indices = @transform_5, window_bounds = array<i64: 128, 128>}, {pipeline_mode = #tpu.pipeline_mode<synchronous>, transform_indices = @transform_6, window_bounds = array<i64: 3, 160>}, {pipeline_mode = #tpu.pipeline_mode<synchronous>, transform_indices = @transform_7, window_bounds = array<i64: 3, 128>}, {transform_indices = @transform_8, window_bounds = array<i64: 1, 8, 128>}]} {
    %c0 = arith.constant 0 : index
    %c0_0 = arith.constant 0 : index
    %c0_1 = arith.constant 0 : index
    %0 = vector.load %arg1[%c0, %c0_0, %c0_1] : memref<1x8x32xf32, #tpu.memory_space<vmem>>, vector<1x8x32xf32>
    %1 = vector.shape_cast %0 : vector<1x8x32xf32> to vector<8x32xf32>
    %c1_i32 = arith.constant 1 : i32
    %2 = tpu.dynamic_rotate %1 by %c1_i32 dim 0 : vector<8x32xf32>, i32 -> vector<8x32xf32>
    %3 = tpu.iota {dimensions = array<i32: 0>} : vector<8x32xi32>
    %c0_i32 = arith.constant 0 : i32
    %4 = vector.broadcast %c0_i32 : i32 to vector<8x32xi32>
    %5 = arith.cmpi eq, %3, %4 : vector<8x32xi32>
    %c0_2 = arith.constant 0 : index
    %c0_3 = arith.constant 0 : index
    %c0_4 = arith.constant 0 : index
    %6 = vector.load %arg2[%c0_2, %c0_3, %c0_4] : memref<1x1x32xf32, #tpu.memory_space<vmem>>, vector<1x1x32xf32>
    %7 = vector.shape_cast %6 : vector<1x1x32xf32> to vector<1x32xf32>
    %8 = vector.shape_cast %7 : vector<1x32xf32> to vector<1x32xf32>
    %9 = vector.broadcast %8 : vector<1x32xf32> to vector<8x32xf32>
    %10 = arith.select %5, %9, %2 : vector<8x32xi1>, vector<8x32xf32>
    %11 = tpu.concatenate %10, %1 in 1 : vector<8x32xf32>, vector<8x32xf32> -> vector<8x64xf32>
    %c0_5 = arith.constant 0 : index
    %c0_6 = arith.constant 0 : index
    %12 = vector.load %arg7[%c0_5, %c0_6] : memref<3x160xf32, #tpu.memory_space<vmem>>, vector<1x160xf32>
    %c1 = arith.constant 1 : index
    %c0_7 = arith.constant 0 : index
    %13 = vector.load %arg7[%c1, %c0_7] : memref<3x160xf32, #tpu.memory_space<vmem>>, vector<1x160xf32>
    %c2 = arith.constant 2 : index
    %c0_8 = arith.constant 0 : index
    %14 = vector.load %arg7[%c2, %c0_8] : memref<3x160xf32, #tpu.memory_space<vmem>>, vector<1x160xf32>
    %c0_9 = arith.constant 0 : index
    %c0_10 = arith.constant 0 : index
    %15 = vector.load %arg3[%c0_9, %c0_10] : memref<64x160xf32, #tpu.memory_space<vmem>>, vector<64x160xf32>
    %cst = arith.constant dense<0.000000e+00> : vector<8x160xf32>
    %16 = tpu.matmul %11, %15, %cst {dimension_numbers = #tpu.dot_dimension_numbers<[1], [0], [0], [1], [0, 0, 1, 1], [], []>} : vector<8x64xf32>, vector<64x160xf32>, vector<8x160xf32> -> vector<8x160xf32>
    %17 = vector.broadcast %12 : vector<1x160xf32> to vector<8x160xf32>
    %18 = arith.addf %16, %17 : vector<8x160xf32>
    %19 = arith.mulf %18, %18 : vector<8x160xf32>
    %c0_11 = arith.constant 0 : index
    %c0_12 = arith.constant 0 : index
    %20 = vector.load %arg4[%c0_11, %c0_12] : memref<160x160xf32, #tpu.memory_space<vmem>>, vector<160x160xf32>
    %cst_13 = arith.constant dense<0.000000e+00> : vector<8x160xf32>
    %21 = tpu.matmul %19, %20, %cst_13 {dimension_numbers = #tpu.dot_dimension_numbers<[1], [0], [0], [1], [0, 0, 1, 1], [], []>} : vector<8x160xf32>, vector<160x160xf32>, vector<8x160xf32> -> vector<8x160xf32>
    %cst_14 = arith.constant 9.99999974E-6 : f32
    %22 = vector.broadcast %cst_14 : f32 to vector<8x160xf32>
    %23 = arith.addf %21, %22 : vector<8x160xf32>
    %24 = math.rsqrt %23 : vector<8x160xf32>
    %25 = arith.mulf %18, %24 : vector<8x160xf32>
    %26 = vector.broadcast %13 : vector<1x160xf32> to vector<8x160xf32>
    %27 = arith.mulf %25, %26 : vector<8x160xf32>
    %28 = vector.broadcast %14 : vector<1x160xf32> to vector<8x160xf32>
    %29 = arith.addf %27, %28 : vector<8x160xf32>
    %cst_15 = arith.constant 0.000000e+00 : f32
    %30 = vector.broadcast %cst_15 : f32 to vector<8x160xf32>
    %31 = arith.maximumf %29, %30 : vector<8x160xf32>
    %c1_i32_16 = arith.constant 1 : i32
    %c0_i32_17 = arith.constant 0 : i32
    %32 = arith.cmpi eq, %c1_i32_16, %c0_i32_17 : i32
    %c1_i32_18 = arith.constant 1 : i32
    %33 = arith.select %32, %c1_i32_18, %c1_i32_16 : i32
    %34 = arith.remsi %arg0, %33 : i32
    %c0_i32_19 = arith.constant 0 : i32
    %35 = arith.cmpi ne, %34, %c0_i32_19 : i32
    %c0_i32_20 = arith.constant 0 : i32
    %36 = arith.cmpi slt, %34, %c0_i32_20 : i32
    %c0_i32_21 = arith.constant 0 : i32
    %37 = arith.cmpi slt, %33, %c0_i32_21 : i32
    %38 = arith.xori %36, %37 : i1
    %39 = arith.andi %38, %35 : i1
    %40 = arith.addi %34, %33 : i32
    %41 = arith.select %39, %40, %34 : i32
    %c0_i32_22 = arith.constant 0 : i32
    %42 = arith.cmpi eq, %41, %c0_i32_22 : i32
    %43 = tpu.iota {dimensions = array<i32: 0>} : vector<8x160xi32>
    %44 = tpu.iota {dimensions = array<i32: 1>} : vector<8x160xi32>
    %c0_i32_23 = arith.constant 0 : i32
    %45 = vector.broadcast %c0_i32_23 : i32 to vector<8x160xi32>
    %46 = arith.cmpi eq, %43, %45 : vector<8x160xi32>
    %c32_i32 = arith.constant 32 : i32
    %47 = vector.broadcast %c32_i32 : i32 to vector<8x160xi32>
    %48 = arith.cmpi slt, %44, %47 : vector<8x160xi32>
    %49 = arith.andi %46, %48 : vector<8x160xi1>
    %50 = vector.broadcast %42 : i1 to vector<8x160xi1>
    %51 = arith.andi %49, %50 : vector<8x160xi1>
    %cst_24 = arith.constant 0.000000e+00 : f32
    %52 = vector.broadcast %cst_24 : f32 to vector<8x160xf32>
    %53 = arith.select %51, %52, %31 : vector<8x160xi1>, vector<8x160xf32>
    %c0_25 = arith.constant 0 : index
    %c0_26 = arith.constant 0 : index
    %54 = vector.load %arg8[%c0_25, %c0_26] : memref<3x128xf32, #tpu.memory_space<vmem>>, vector<1x128xf32>
    %c1_27 = arith.constant 1 : index
    %c0_28 = arith.constant 0 : index
    %55 = vector.load %arg8[%c1_27, %c0_28] : memref<3x128xf32, #tpu.memory_space<vmem>>, vector<1x128xf32>
    %c2_29 = arith.constant 2 : index
    %c0_30 = arith.constant 0 : index
    %56 = vector.load %arg8[%c2_29, %c0_30] : memref<3x128xf32, #tpu.memory_space<vmem>>, vector<1x128xf32>
    %c0_31 = arith.constant 0 : index
    %c0_32 = arith.constant 0 : index
    %57 = vector.load %arg5[%c0_31, %c0_32] : memref<160x128xf32, #tpu.memory_space<vmem>>, vector<160x128xf32>
    %cst_33 = arith.constant dense<0.000000e+00> : vector<8x128xf32>
    %58 = tpu.matmul %53, %57, %cst_33 {dimension_numbers = #tpu.dot_dimension_numbers<[1], [0], [0], [1], [0, 0, 1, 1], [], []>} : vector<8x160xf32>, vector<160x128xf32>, vector<8x128xf32> -> vector<8x128xf32>
    %59 = vector.broadcast %54 : vector<1x128xf32> to vector<8x128xf32>
    %60 = arith.addf %58, %59 : vector<8x128xf32>
    %61 = arith.mulf %60, %60 : vector<8x128xf32>
    %c0_34 = arith.constant 0 : index
    %c0_35 = arith.constant 0 : index
    %62 = vector.load %arg6[%c0_34, %c0_35] : memref<128x128xf32, #tpu.memory_space<vmem>>, vector<128x128xf32>
    %cst_36 = arith.constant dense<0.000000e+00> : vector<8x128xf32>
    %63 = tpu.matmul %61, %62, %cst_36 {dimension_numbers = #tpu.dot_dimension_numbers<[1], [0], [0], [1], [0, 0, 1, 1], [], []>} : vector<8x128xf32>, vector<128x128xf32>, vector<8x128xf32> -> vector<8x128xf32>
    %cst_37 = arith.constant 9.99999974E-6 : f32
    %64 = vector.broadcast %cst_37 : f32 to vector<8x128xf32>
    %65 = arith.addf %63, %64 : vector<8x128xf32>
    %66 = math.rsqrt %65 : vector<8x128xf32>
    %67 = arith.mulf %60, %66 : vector<8x128xf32>
    %68 = vector.broadcast %55 : vector<1x128xf32> to vector<8x128xf32>
    %69 = arith.mulf %67, %68 : vector<8x128xf32>
    %70 = vector.broadcast %56 : vector<1x128xf32> to vector<8x128xf32>
    %71 = arith.addf %69, %70 : vector<8x128xf32>
    %cst_38 = arith.constant 0.000000e+00 : f32
    %72 = vector.broadcast %cst_38 : f32 to vector<8x128xf32>
    %73 = arith.maximumf %71, %72 : vector<8x128xf32>
    %c0_39 = arith.constant 0 : index
    %c0_40 = arith.constant 0 : index
    %c0_41 = arith.constant 0 : index
    %74 = vector.load %arg9[%c0_39, %c0_40, %c0_41] : memref<1x8x128xf32, #tpu.memory_space<vmem>>, vector<1x8x128xf32>
    %75 = vector.shape_cast %74 : vector<1x8x128xf32> to vector<8x128xf32>
    %76 = vector.shape_cast %73 : vector<8x128xf32> to vector<1x8x128xf32>
    tpu.vector_store %arg9[%c0_39, %c0_40, %c0_41], %76 {strides = array<i32>} : memref<1x8x128xf32, #tpu.memory_space<vmem>>, vector<1x8x128xf32>,
    return
  }
  func.func @transform_0(%arg0: i32) -> (i32, i32, i32) {
    %c0_i32 = arith.constant 0 : i32
    %c0_i32_0 = arith.constant 0 : i32
    %c0_i32_1 = arith.constant 0 : i32
    return %arg0, %c0_i32, %c0_i32_0 : i32, i32, i32
  }
  func.func @transform_1(%arg0: i32) -> (i32, i32, i32) {
    %c0_i32 = arith.constant 0 : i32
    %c0_i32_0 = arith.constant 0 : i32
    %c0_i32_1 = arith.constant 0 : i32
    return %arg0, %c0_i32, %c0_i32_0 : i32, i32, i32
  }
  func.func @transform_2(%arg0: i32) -> (i32, i32) {
    %c0_i32 = arith.constant 0 : i32
    %c0_i32_0 = arith.constant 0 : i32
    %c0_i32_1 = arith.constant 0 : i32
    return %c0_i32, %c0_i32_0 : i32, i32
  }
  func.func @transform_3(%arg0: i32) -> (i32, i32) {
    %c0_i32 = arith.constant 0 : i32
    %c0_i32_0 = arith.constant 0 : i32
    %c0_i32_1 = arith.constant 0 : i32
    return %c0_i32, %c0_i32_0 : i32, i32
  }
  func.func @transform_4(%arg0: i32) -> (i32, i32) {
    %c0_i32 = arith.constant 0 : i32
    %c0_i32_0 = arith.constant 0 : i32
    %c0_i32_1 = arith.constant 0 : i32
    return %c0_i32, %c0_i32_0 : i32, i32
  }
  func.func @transform_5(%arg0: i32) -> (i32, i32) {
    %c0_i32 = arith.constant 0 : i32
    %c0_i32_0 = arith.constant 0 : i32
    %c0_i32_1 = arith.constant 0 : i32
    return %c0_i32, %c0_i32_0 : i32, i32
  }
  func.func @transform_6(%arg0: i32) -> (i32, i32) {
    %c0_i32 = arith.constant 0 : i32
    %c0_i32_0 = arith.constant 0 : i32
    %c0_i32_1 = arith.constant 0 : i32
    return %c0_i32, %c0_i32_0 : i32, i32
  }
  func.func @transform_7(%arg0: i32) -> (i32, i32) {
    %c0_i32 = arith.constant 0 : i32
    %c0_i32_0 = arith.constant 0 : i32
    %c0_i32_1 = arith.constant 0 : i32
    return %c0_i32, %c0_i32_0 : i32, i32
  }
  func.func @transform_8(%arg0: i32) -> (i32, i32, i32) {
    %c0_i32 = arith.constant 0 : i32
    %c0_i32_0 = arith.constant 0 : i32
    %c0_i32_1 = arith.constant 0 : i32
    return %arg0, %c0_i32, %c0_i32_0 : i32, i32, i32
  }
}

</mosaic_0001>

<llo_original>
// kernel: tile.29
$region0: #{tile.29}
  #allocation0 [shape = 's32[1]{0}', space=sflag, size = 0x4, scoped, tag = 'scoped memory for tile.29']
  %s0 = inlined_call_operand.vmem [shape: f32[32], index: 0, kind: input, shape index: {}]
  %s1 = inlined_call_operand.vmem [shape: f32[5,32], index: 1, kind: output, shape index: {}]
  // Predicated region
  $region2: #{tile.29} parent=0 // pred_check
    _
  $region3: #{tile.29} parent=0 // pred_check_branch
    %3 = sbr.rel (0) target = $region5
  $region4: #{tile.29} parent=0 // pred_region
    _
  $region5: #{tile.29} parent=0 // pred_fallthru
    _
  %v4 = vld [vmem:[%s0] ss:$0 sm:$0xff]
  %5 = vst [vmem:[%s1] sm:$0xff] %v4

// kernel: tile.36
$region0: #{tile.36}
  %s0 = inlined_call_operand.vmem [shape: f32[5,32], index: 0, kind: input, shape index: {}]
  %s1 = inlined_call_operand.vmem [shape: f32[1,160], index: 1, kind: output, shape index: {}]
  $region1: #{tile.36} parent=0
    #allocation0 [shape = 'u8[8192]{0}', space=vmem, size = 0x2000, scoped, tag = 'scoped mem for output reshape']
    %s2 = smov 3
    %v3 = vld [vmem:[%s0] ss:$4 sm:%s2]
    %vm4 = vcmask 261120
    %5 = vst.msk [vmem:[#allocation0] ss:$8 sm:$0x3] %vm4, %v3
    %s6 = scalar_lea.vmem %s0, 3
    %v7 = vld [vmem:[%s6] sm:$0x1]
    %8 = vrot.lane.b32.xlu0 %v7, 96
    %v9 = vpop.permute.xlu0 %8
    %vm10 = vcmask 1048320
    %11 = vst.msk [vmem:[#allocation0] sm:$0x1] %vm10, %v9
    %s12 = scalar_lea.vmem %s0, 2
    %v13 = vld [vmem:[%s12] sm:$0x1]
    %14 = vrot.lane.b32.xlu0 %v13, 64
    %v15 = vpop.permute.xlu0 %14
    %vm16 = vcmask 785920
    %17 = vst.msk [vmem:[#allocation0] sm:$0x1] %vm16, %v15
    %s18 = scalar_lea.vmem %s0, 1
    %v19 = vld [vmem:[%s18] sm:$0x1]
    %20 = vrot.lane.b32.xlu0 %v19, 32
    %v21 = vpop.permute.xlu0 %20
    %vm22 = vcmask 523520
    %23 = vst.msk [vmem:[#allocation0] sm:$0x1] %vm22, %v21
    %s25 = sshll.u32 1, 1
    %s26 = ssub.s32 %s25, 1
    %v28 = vld [vmem:[#allocation0] sm:%s26]
    %s29 = sshll.u32 1, 1
    %s30 = ssub.s32 %s29, 1
    %31 = vst [vmem:[%s1] sm:%s30] %v28
    %s32 = scalar_lea.vmem [#allocation0], 8
    %v33 = vld [vmem:[%s32] sm:%s26]
    %s34 = sshll.u32 1, 1
    %s35 = ssub.s32 %s34, 1
    %s36 = scalar_lea.vmem %s1, 1
    %37 = vst [vmem:[%s36] sm:%s35] %v33

// kernel: tile.42
$region0: #{tile.42}
  #allocation0 [shape = 's32[1]{0}', space=sflag, size = 0x4, scoped, tag = 'scoped memory for tile.42']
  %s0 = inlined_call_operand.vmem [shape: f32[64], index: 0, kind: input, shape index: {}]
  %s1 = inlined_call_operand.vmem [shape: f32[2,64], index: 1, kind: output, shape index: {}]
  // Predicated region
  $region2: #{tile.42} parent=0 // pred_check
    _
  $region3: #{tile.42} parent=0 // pred_check_branch
    %3 = sbr.rel (0) target = $region5
  $region4: #{tile.42} parent=0 // pred_region
    _
  $region5: #{tile.42} parent=0 // pred_fallthru
    _
  %v4 = vld [vmem:[%s0] ss:$0 sm:$0xff]
  %5 = vst [vmem:[%s1] sm:$0x3] %v4

// kernel: tile.49
$region0: #{tile.49}
  %s0 = inlined_call_operand.vmem [shape: f32[2,64], index: 0, kind: input, shape index: {}]
  %s1 = inlined_call_operand.vmem [shape: f32[1,128], index: 1, kind: output, shape index: {}]
  $region1: #{tile.49} parent=0
    #allocation0 [shape = 'u8[4096]{0}', space=vmem, size = 0x1000, scoped, tag = 'scoped mem for output reshape']
    #allocation1 [shape = 'u8[4096]{0}', space=vmem, size = 0x1000, scoped, tag = 'scoped mem for input reshape']
    %s3 = sshll.u32 1, 2
    %s4 = ssub.s32 %s3, 1
    %v5 = vld [vmem:[%s0] sm:%s4]
    %6 = vst [vmem:[#allocation1] sm:%s4] %v5
    %v7 = vld [vmem:[#allocation1] sm:$0x1]
    %vm8 = vcmask 523264
    %9 = vst.msk [vmem:[#allocation0] sm:$0x1] %vm8, %v7
    %s10 = scalar_lea.vmem [#allocation1], 1
    %v11 = vld [vmem:[%s10] sm:$0x1]
    %12 = vrot.lane.b32.xlu0 %v11, 64
    %v13 = vpop.permute.xlu0 %12
    %vm14 = vcmask 1048064
    %15 = vst.msk [vmem:[#allocation0] sm:$0x1] %vm14, %v13
    %s17 = sshll.u32 1, 1
    %s18 = ssub.s32 %s17, 1
    %v20 = vld [vmem:[#allocation0] sm:%s18]
    %s21 = sshll.u32 1, 1
    %s22 = ssub.s32 %s21, 1
    %23 = vst [vmem:[%s1] sm:%s22] %v20

// kernel: _lambda_.1
$region0: #{_lambda_.1}
  #allocation0 [shape = 'u32[]', space=smem, size = 0x4, offset = 0x4, fixed_abs, tag = 'smem constant byte address 0x4 - core index']
  #allocation1 [shape = 'u32[144,128]{1,0:T(1,128)}', space=vmem, size = 0x12000, scoped, tag = 'internal scratch']
  %s0 = inlined_call_operand.vmem [shape: f32[2,8,32], index: 0, kind: input, shape index: {}]
  %s1 = inlined_call_operand.vmem [shape: f32[2,1,32], index: 1, kind: input, shape index: {}]
  %s2 = inlined_call_operand.vmem [shape: f32[64,160], index: 2, kind: input, shape index: {}]
  %s3 = inlined_call_operand.vmem [shape: f32[160,160], index: 3, kind: input, shape index: {}]
  %s4 = inlined_call_operand.vmem [shape: f32[160,128], index: 4, kind: input, shape index: {}]
  %s5 = inlined_call_operand.vmem [shape: f32[128,128], index: 5, kind: input, shape index: {}]
  %s6 = inlined_call_operand.vmem [shape: f32[3,160], index: 6, kind: input, shape index: {}]
  %s7 = inlined_call_operand.vmem [shape: f32[3,128], index: 7, kind: input, shape index: {}]
  %s8 = inlined_call_operand.vmem [shape: f32[2,8,128], index: 8, kind: output, shape index: {}]
  %s9 = sld [smem:[#allocation0]]
  $region65: #{_lambda_.1} parent=0
    _
  %s11 = ssub.s32 1, %s9
  %s12 = scalar_select 0, %s11, %s9
  loop: start=0, step=1, limit=4
  $region2: #{_lambda_.1} parent=0 // loop_pre_header
    _
  $region3: #{_lambda_.1} parent=0 // loop_header
    %s14 = sphi 0, %s18
    %p15 = scmp.ge.s32.totalorder %s14, 4
    %s24 = sphi 0, %s26
    %s27 = sphi 0, %s24
    %s28 = sphi 0, %s27
    %s44 = sphi 0, %s28
    %s50 = sphi 0, %s52
    %s53 = sphi 0, %s50
    %s54 = sphi 0, %s53
    %s70 = sphi 0, %s54
    %s74 = sphi 0, %s74
    %s76 = sphi 0, %s74
    %s77 = sphi 0, %s76
    %s91 = sphi 0, %s77
    %s95 = sphi 0, %s95
    %s97 = sphi 0, %s95
    %s98 = sphi 0, %s97
    %s112 = sphi 0, %s98
    %s116 = sphi 0, %s116
    %s118 = sphi 0, %s116
    %s119 = sphi 0, %s118
    %s133 = sphi 0, %s119
    %s137 = sphi 0, %s137
    %s139 = sphi 0, %s137
    %s140 = sphi 0, %s139
    %s154 = sphi 0, %s140
    %s158 = sphi 0, %s158
    %s160 = sphi 0, %s158
    %s161 = sphi 0, %s160
    %s175 = sphi 0, %s161
    %s179 = sphi 0, %s179
    %s181 = sphi 0, %s179
    %s182 = sphi 0, %s181
    %s196 = sphi 0, %s182
    %s202 = sphi 0, %s204
    %s205 = sphi 0, %s202
    %s206 = sphi 0, %s205
    %s222 = sphi 0, %s206
  $region4: #{_lambda_.1} parent=0 // loop_header_branch
    %17 = sbr.rel (%p15) target = $region8
  $region5: #{_lambda_.1} parent=0 // loop_body
    %s19 = ssub.s32 %s14, 1
    %s20 = ssub.s32 %s14, 2
    %s21 = sadd.s32 %s14, 1
    %s22 = ssub.s32 %s14, %s21
    %p23 = scmp.eq.s32.totalorder %s22, 0
    %s25 = sadd.s32 %s24, 1
    %s26 = scalar_select %p23, %s24, %s25
    %p29 = pneg %p23
    %p30 = scmp.eq.s32.totalorder %s14, 1
    %p31 = por %p29, %p30
    %p32 = scmp.ne.s32.totalorder %s24, %s27
    %p33 = scmp.eq.s32.totalorder %s14, 0
    %p34 = por %p32, %p33
    %p35 = scmp.ne.s32.totalorder %s24, %s27
    %p36 = scmp.eq.s32.totalorder %s19, 1
    %p37 = por %p35, %p36
    %p38 = scmp.ne.s32.totalorder %s27, %s28
    %p39 = scmp.eq.s32.totalorder %s19, 0
    %p40 = por %p38, %p39
    %p41 = scmp.ne.s32.totalorder %s27, %s28
    %p42 = scmp.eq.s32.totalorder %s20, 1
    %p43 = por %p41, %p42
    %p45 = scmp.ne.s32.totalorder %s28, %s44
    %p46 = scmp.eq.s32.totalorder %s20, 0
    %p47 = por %p45, %p46
    %s48 = ssub.s32 %s14, %s21
    %p49 = scmp.eq.s32.totalorder %s48, 0
    %s51 = sadd.s32 %s50, 1
    %s52 = scalar_select %p49, %s50, %s51
    %p55 = pneg %p49
    %p56 = scmp.eq.s32.totalorder %s14, 1
    %p57 = por %p55, %p56
    %p58 = scmp.ne.s32.totalorder %s50, %s53
    %p59 = scmp.eq.s32.totalorder %s14, 0
    %p60 = por %p58, %p59
    %p61 = scmp.ne.s32.totalorder %s50, %s53
    %p62 = scmp.eq.s32.totalorder %s19, 1
    %p63 = por %p61, %p62
    %p64 = scmp.ne.s32.totalorder %s53, %s54
    %p65 = scmp.eq.s32.totalorder %s19, 0
    %p66 = por %p64, %p65
    %p67 = scmp.ne.s32.totalorder %s53, %s54
    %p68 = scmp.eq.s32.totalorder %s20, 1
    %p69 = por %p67, %p68
    %p71 = scmp.ne.s32.totalorder %s54, %s70
    %p72 = scmp.eq.s32.totalorder %s20, 0
    %p73 = por %p71, %p72
    %s75 = sadd.s32 %s74, 1
    %p78 = scmp.eq.s32.totalorder %s14, 1
    %p79 = scmp.ne.s32.totalorder %s74, %s76
    %p80 = scmp.eq.s32.totalorder %s14, 0
    %p81 = por %p79, %p80
    %p82 = scmp.ne.s32.totalorder %s74, %s76
    %p83 = scmp.eq.s32.totalorder %s19, 1
    %p84 = por %p82, %p83
    %p85 = scmp.ne.s32.totalorder %s76, %s77
    %p86 = scmp.eq.s32.totalorder %s19, 0
    %p87 = por %p85, %p86
    %p88 = scmp.ne.s32.totalorder %s76, %s77
    %p89 = scmp.eq.s32.totalorder %s20, 1
    %p90 = por %p88, %p89
    %p92 = scmp.ne.s32.totalorder %s77, %s91
    %p93 = scmp.eq.s32.totalorder %s20, 0
    %p94 = por %p92, %p93
    %s96 = sadd.s32 %s95, 1
    %p99 = scmp.eq.s32.totalorder %s14, 1
    %p100 = scmp.ne.s32.totalorder %s95, %s97
    %p101 = scmp.eq.s32.totalorder %s14, 0
    %p102 = por %p100, %p101
    %p103 = scmp.ne.s32.totalorder %s95, %s97
    %p104 = scmp.eq.s32.totalorder %s19, 1
    %p105 = por %p103, %p104
    %p106 = scmp.ne.s32.totalorder %s97, %s98
    %p107 = scmp.eq.s32.totalorder %s19, 0
    %p108 = por %p106, %p107
    %p109 = scmp.ne.s32.totalorder %s97, %s98
    %p110 = scmp.eq.s32.totalorder %s20, 1
    %p111 = por %p109, %p110
    %p113 = scmp.ne.s32.totalorder %s98, %s112
    %p114 = scmp.eq.s32.totalorder %s20, 0
    %p115 = por %p113, %p114
    %s117 = sadd.s32 %s116, 1
    %p120 = scmp.eq.s32.totalorder %s14, 1
    %p121 = scmp.ne.s32.totalorder %s116, %s118
    %p122 = scmp.eq.s32.totalorder %s14, 0
    %p123 = por %p121, %p122
    %p124 = scmp.ne.s32.totalorder %s116, %s118
    %p125 = scmp.eq.s32.totalorder %s19, 1
    %p126 = por %p124, %p125
    %p127 = scmp.ne.s32.totalorder %s118, %s119
    %p128 = scmp.eq.s32.totalorder %s19, 0
    %p129 = por %p127, %p128
    %p130 = scmp.ne.s32.totalorder %s118, %s119
    %p131 = scmp.eq.s32.totalorder %s20, 1
    %p132 = por %p130, %p131
    %p134 = scmp.ne.s32.totalorder %s119, %s133
    %p135 = scmp.eq.s32.totalorder %s20, 0
    %p136 = por %p134, %p135
    %s138 = sadd.s32 %s137, 1
    %p141 = scmp.eq.s32.totalorder %s14, 1
    %p142 = scmp.ne.s32.totalorder %s137, %s139
    %p143 = scmp.eq.s32.totalorder %s14, 0
    %p144 = por %p142, %p143
    %p145 = scmp.ne.s32.totalorder %s137, %s139
    %p146 = scmp.eq.s32.totalorder %s19, 1
    %p147 = por %p145, %p146
    %p148 = scmp.ne.s32.totalorder %s139, %s140
    %p149 = scmp.eq.s32.totalorder %s19, 0
    %p150 = por %p148, %p149
    %p151 = scmp.ne.s32.totalorder %s139, %s140
    %p152 = scmp.eq.s32.totalorder %s20, 1
    %p153 = por %p151, %p152
    %p155 = scmp.ne.s32.totalorder %s140, %s154
    %p156 = scmp.eq.s32.totalorder %s20, 0
    %p157 = por %p155, %p156
    %s159 = sadd.s32 %s158, 1
    %p162 = scmp.eq.s32.totalorder %s14, 1
    %p163 = scmp.ne.s32.totalorder %s158, %s160
    %p164 = scmp.eq.s32.totalorder %s14, 0
    %p165 = por %p163, %p164
    %p166 = scmp.ne.s32.totalorder %s158, %s160
    %p167 = scmp.eq.s32.totalorder %s19, 1
    %p168 = por %p166, %p167
    %p169 = scmp.ne.s32.totalorder %s160, %s161
    %p170 = scmp.eq.s32.totalorder %s19, 0
    %p171 = por %p169, %p170
    %p172 = scmp.ne.s32.totalorder %s160, %s161
    %p173 = scmp.eq.s32.totalorder %s20, 1
    %p174 = por %p172, %p173
    %p176 = scmp.ne.s32.totalorder %s161, %s175
    %p177 = scmp.eq.s32.totalorder %s20, 0
    %p178 = por %p176, %p177
    %s180 = sadd.s32 %s179, 1
    %p183 = scmp.eq.s32.totalorder %s14, 1
    %p184 = scmp.ne.s32.totalorder %s179, %s181
    %p185 = scmp.eq.s32.totalorder %s14, 0
    %p186 = por %p184, %p185
    %p187 = scmp.ne.s32.totalorder %s179, %s181
    %p188 = scmp.eq.s32.totalorder %s19, 1
    %p189 = por %p187, %p188
    %p190 = scmp.ne.s32.totalorder %s181, %s182
    %p191 = scmp.eq.s32.totalorder %s19, 0
    %p192 = por %p190, %p191
    %p193 = scmp.ne.s32.totalorder %s181, %s182
    %p194 = scmp.eq.s32.totalorder %s20, 1
    %p195 = por %p193, %p194
    %p197 = scmp.ne.s32.totalorder %s182, %s196
    %p198 = scmp.eq.s32.totalorder %s20, 0
    %p199 = por %p197, %p198
    %s200 = ssub.s32 %s14, %s21
    %p201 = scmp.eq.s32.totalorder %s200, 0
    %s203 = sadd.s32 %s202, 1
    %s204 = scalar_select %p201, %s202, %s203
    %p207 = pneg %p201
    %p208 = scmp.eq.s32.totalorder %s14, 1
    %p209 = por %p207, %p208
    %p210 = scmp.ne.s32.totalorder %s202, %s205
    %p211 = scmp.eq.s32.totalorder %s14, 0
    %p212 = por %p210, %p211
    %p213 = scmp.ne.s32.totalorder %s202, %s205
    %p214 = scmp.eq.s32.totalorder %s19, 1
    %p215 = por %p213, %p214
    %p216 = scmp.ne.s32.totalorder %s205, %s206
    %p217 = scmp.eq.s32.totalorder %s19, 0
    %p218 = por %p216, %p217
    %p219 = scmp.ne.s32.totalorder %s205, %s206
    %p220 = scmp.eq.s32.totalorder %s20, 1
    %p221 = por %p219, %p220
    %p223 = scmp.ne.s32.totalorder %s206, %s222
    %p224 = scmp.eq.s32.totalorder %s20, 0
    %p225 = por %p223, %p224
    %p226 = scmp.le.s32.totalorder 1, %s14
    %p227 = scmp.lt.s32.totalorder %s14, 3
    %p228 = pnand %p226, %p227
    %p229 = pneg %p228
    // Predicated region
    $region9: #{_lambda_.1} parent=5 // pred_check
      _
    $region10: #{_lambda_.1} parent=5 // pred_check_branch
      %231 = sbr.rel (%p228) target = $region12
    $region11: #{_lambda_.1} parent=5 // pred_region
      %s232 = ssub.s32 %s14, 1
      // Predicated region
      $region13: #{_lambda_.1} parent=11 // pred_check
        %p233 = pneg %p87
      $region14: #{_lambda_.1} parent=11 // pred_check_branch
        %235 = sbr.rel (%p233) target = $region16
      $region15: #{_lambda_.1} parent=11 // pred_region
        _
      $region16: #{_lambda_.1} parent=11 // pred_fallthru
        _
      // Predicated region
      $region17: #{_lambda_.1} parent=11 // pred_check
        %p236 = pneg %p108
      $region18: #{_lambda_.1} parent=11 // pred_check_branch
        %238 = sbr.rel (%p236) target = $region20
      $region19: #{_lambda_.1} parent=11 // pred_region
        _
      $region20: #{_lambda_.1} parent=11 // pred_fallthru
        _
      // Predicated region
      $region21: #{_lambda_.1} parent=11 // pred_check
        %p239 = pneg %p129
      $region22: #{_lambda_.1} parent=11 // pred_check_branch
        %241 = sbr.rel (%p239) target = $region24
      $region23: #{_lambda_.1} parent=11 // pred_region
        _
      $region24: #{_lambda_.1} parent=11 // pred_fallthru
        _
      // Predicated region
      $region25: #{_lambda_.1} parent=11 // pred_check
        %p242 = pneg %p150
      $region26: #{_lambda_.1} parent=11 // pred_check_branch
        %244 = sbr.rel (%p242) target = $region28
      $region27: #{_lambda_.1} parent=11 // pred_region
        _
      $region28: #{_lambda_.1} parent=11 // pred_fallthru
        _
      // Predicated region
      $region29: #{_lambda_.1} parent=11 // pred_check
        %p245 = pneg %p171
      $region30: #{_lambda_.1} parent=11 // pred_check_branch
        %247 = sbr.rel (%p245) target = $region32
      $region31: #{_lambda_.1} parent=11 // pred_region
        _
      $region32: #{_lambda_.1} parent=11 // pred_fallthru
        _
      // Predicated region
      $region33: #{_lambda_.1} parent=11 // pred_check
        %p248 = pneg %p192
      $region34: #{_lambda_.1} parent=11 // pred_check_branch
        %250 = sbr.rel (%p248) target = $region36
      $region35: #{_lambda_.1} parent=11 // pred_region
        _
      $region36: #{_lambda_.1} parent=11 // pred_fallthru
        _
    $region12: #{_lambda_.1} parent=5 // pred_fallthru
      _
    %p251 = scmp.lt.s32.totalorder %s14, 2
    // Predicated region
    $region37: #{_lambda_.1} parent=5 // pred_check
      %p252 = pneg %p251
    $region38: #{_lambda_.1} parent=5 // pred_check_branch
      %254 = sbr.rel (%p252) target = $region40
    $region39: #{_lambda_.1} parent=5 // pred_region
      // Predicated region
      $region41: #{_lambda_.1} parent=39 // pred_check
        %p255 = pneg %p34
      $region42: #{_lambda_.1} parent=39 // pred_check_branch
        %257 = sbr.rel (%p255) target = $region44
      $region43: #{_lambda_.1} parent=39 // pred_region
        %p258 = scmp.lt.s32.totalorder %s14, 1
        %s259 = scalar_select %p258, %s14, 1
        %s260 = smul.addr %s259, 8
        %s261 = scalar_lea.vmem %s0, %s260
      $region44: #{_lambda_.1} parent=39 // pred_fallthru
        _
      // Predicated region
      $region45: #{_lambda_.1} parent=39 // pred_check
        %p262 = pneg %p60
      $region46: #{_lambda_.1} parent=39 // pred_check_branch
        %264 = sbr.rel (%p262) target = $region48
      $region47: #{_lambda_.1} parent=39 // pred_region
        %p265 = scmp.lt.s32.totalorder %s14, 1
        %s266 = scalar_select %p265, %s14, 1
        %s267 = scalar_lea.vmem %s1, %s266
      $region48: #{_lambda_.1} parent=39 // pred_fallthru
        _
    $region40: #{_lambda_.1} parent=5 // pred_fallthru
      _
    %p268 = scmp.le.s32.totalorder 1, %s14
    %p269 = scmp.lt.s32.totalorder %s14, 3
    %p270 = pnand %p268, %p269
    %p271 = pneg %p270
    // Predicated region
    $region49: #{_lambda_.1} parent=5 // pred_check
      _
    $region50: #{_lambda_.1} parent=5 // pred_check_branch
      %273 = sbr.rel (%p270) target = $region52
    $region51: #{_lambda_.1} parent=5 // pred_region
      %s274 = ssub.s32 %s14, 1
      %p275 = scmp.lt.s32.totalorder %s19, 1
      %s276 = scalar_select %p275, %s19, 1
      %s277 = smul.addr %s276, 8
      %s278 = scalar_lea.vmem %s0, %s277
      %p279 = pneg %p40
      %p280 = pneg %p37
      %p281 = scmp.lt.s32.totalorder %s19, 1
      %s282 = scalar_select %p281, %s19, 1
      %s283 = scalar_lea.vmem %s1, %s282
      %p284 = pneg %p66
      %p285 = pneg %p63
      %p286 = pneg %p87
      %p287 = pneg %p84
      %p288 = pneg %p108
      %p289 = pneg %p105
      %p290 = pneg %p129
      %p291 = pneg %p126
      %p292 = pneg %p150
      %p293 = pneg %p147
      %p294 = pneg %p171
      %p295 = pneg %p168
      %p296 = pneg %p192
      %p297 = pneg %p189
      %p298 = pneg %p218
      %p299 = pneg %p215
      %p300 = scmp.lt.s32.totalorder %s19, 1
      %s301 = scalar_select %p300, %s19, 1
      %s302 = smul.addr %s301, 8
      %s303 = scalar_lea.vmem %s8, %s302
      %p304 = scmp.lt.s32.totalorder %s19, 1
      %s305 = scalar_select %p304, %s19, 1
      %s306 = smul.addr %s305, 8
      %s307 = scalar_lea.vmem %s0, %s306
      %p308 = scmp.lt.s32.totalorder %s19, 1
      %s309 = scalar_select %p308, %s19, 1
      %s310 = scalar_lea.vmem %s1, %s309
      %p311 = scmp.lt.s32.totalorder %s19, 1
      %s312 = scalar_select %p311, %s19, 1
      %s313 = smul.addr %s312, 8
      %s314 = scalar_lea.vmem %s8, %s313
      %v315 = vld [vmem:[%s307] sm:$0xff]
      %v316 = vrot.slane %v315, 7
      %v317 = vlaneseq
      %v318 = vshrl.u32 %v317, 7
      %vm319 = vcmp.eq.s32.totalorder %v318, 0
      %v320 = vld [vmem:[%s310] sm:$0x1]
      %v322 = vlaneseq
      %v323 = vshrl.u32 %v322, 7
      %v324 = vsub.s32 0, %v323
      %v325 = vrot.slane %v320, %v324
      %v327 = vsel %vm319, %v325, %v316
      %329 = vrot.lane.b32.xlu0 %v315, 32
      %v330 = vpop.permute.xlu0 %329
      %vm332 = vcmask 261120
      %v333 = vsel %vm332, %v327, %v330
      %v334 = vld [vmem:[%s6] ss:$4 sm:$0x3]
      %s335 = scalar_lea.vmem %s6, 1
      %v336 = vld [vmem:[%s335] ss:$4 sm:$0x3]
      %s337 = scalar_lea.vmem %s6, 2
      %v338 = vld [vmem:[%s337] ss:$4 sm:$0x3]
      %v339 = vld [vmem:[%s2] sm:$0xff]
      %v340 = vld [vmem:[%s2 + $0x8] sm:$0xff]
      %v341 = vld [vmem:[%s2 + $0x10] sm:$0xff]
      %v342 = vld [vmem:[%s2 + $0x18] sm:$0xff]
      %v343 = vld [vmem:[%s2 + $0x20] sm:$0xff]
      %v344 = vld [vmem:[%s2 + $0x28] sm:$0xff]
      %v345 = vld [vmem:[%s2 + $0x30] sm:$0xff]
      %v346 = vld [vmem:[%s2 + $0x38] sm:$0xff]
      %v347 = vld [vmem:[%s2 + $0x40] sm:$0xff]
      %v348 = vld [vmem:[%s2 + $0x48] sm:$0xff]
      %v349 = vld [vmem:[%s2 + $0x50] sm:$0xff]
      %v350 = vld [vmem:[%s2 + $0x58] sm:$0xff]
      %v351 = vld [vmem:[%s2 + $0x60] sm:$0xff]
      %v352 = vld [vmem:[%s2 + $0x68] sm:$0xff]
      %v353 = vld [vmem:[%s2 + $0x70] sm:$0xff]
      %v354 = vld [vmem:[%s2 + $0x78] sm:$0xff]
      %v356 = vlaneseq
      %v357 = vshrl.u32 %v356, 7
      %v358 = vsub.s32 0, %v357
      %v359 = vrot.slane %v334, %v358
      %v360 = vlaneseq
      %v361 = vshrl.u32 %v360, 7
      %v362 = vsub.s32 1, %v361
      %v363 = vrot.slane %v334, %v362
      %vm366 = vcmask 523264
      %v368 = vsel %vm366, %v333, 0
      %370 = vmatprep.subr.mxu0 0.0
      %371 = vmatpush1.msra.mxu0 0.0
      %372 = vmatprep.subr.mxu0 0.0
      %373 = vmatpush1.msra.mxu0 0.0
      %374 = vmatprep.subr.mxu0 0.0
      %375 = vmatpush1.msra.mxu0 0.0
      %376 = vmatprep.subr.mxu0 0.0
      %377 = vmatpush1.msra.mxu0 0.0
      %378 = vmatprep.subr.mxu0 0.0
      %379 = vmatpush1.msra.mxu0 0.0
      %380 = vmatprep.subr.mxu0 0.0
      %381 = vmatpush1.msra.mxu0 0.0
      %382 = vmatprep.subr.mxu0 0.0
      %383 = vmatpush1.msra.mxu0 0.0
      %384 = vmatprep.subr.mxu0 0.0
      %385 = vmatpush1.msra.mxu0 0.0
      %386 = vmatprep.subr.mxu0 %v354
      %387 = vmatpush1.msra.mxu0 %v353
      %388 = vmatprep.subr.mxu0 %v352
      %389 = vmatpush1.msra.mxu0 %v351
      %390 = vmatprep.subr.mxu0 %v350
      %391 = vmatpush1.msra.mxu0 %v349
      %392 = vmatprep.subr.mxu0 %v348
      %393 = vmatpush1.msra.mxu0 %v347
      %394 = vmatprep.subr.mxu0 %v346
      %395 = vmatpush1.msra.mxu0 %v345
      %396 = vmatprep.subr.mxu0 %v344
      %397 = vmatpush1.msra.mxu0 %v343
      %398 = vmatprep.subr.mxu0 %v342
      %399 = vmatpush1.msra.mxu0 %v341
      %400 = vmatprep.subr.mxu0 %v340
      %401 = vmatpush1.msra.mxu0 %v339
      %402 = vmatprep.subr.mxu0 0.0
      %403 = vmatpush2.msra.mxu0 0.0
      %404 = vmatprep.subr.mxu0 0.0
      %405 = vmatpush2.msra.mxu0 0.0
      %406 = vmatprep.subr.mxu0 0.0
      %407 = vmatpush2.msra.mxu0 0.0
      %408 = vmatprep.subr.mxu0 0.0
      %409 = vmatpush2.msra.mxu0 0.0
      %410 = vmatprep.subr.mxu0 0.0
      %411 = vmatpush2.msra.mxu0 0.0
      %412 = vmatprep.subr.mxu0 0.0
      %413 = vmatpush2.msra.mxu0 0.0
      %414 = vmatprep.subr.mxu0 0.0
      %415 = vmatpush2.msra.mxu0 0.0
      %416 = vmatprep.subr.mxu0 0.0
      %417 = vmatpush2.msra.mxu0 0.0
      %418 = vmatprep.subr.mxu0 0.0
      %419 = vmatpush2.msra.mxu0 0.0
      %420 = vmatprep.subr.mxu0 0.0
      %421 = vmatpush2.msra.mxu0 0.0
      %422 = vmatprep.subr.mxu0 0.0
      %423 = vmatpush2.msra.mxu0 0.0
      %424 = vmatprep.subr.mxu0 0.0
      %425 = vmatpush2.msra.mxu0 0.0
      %426 = vmatprep.subr.mxu0 0.0
      %427 = vmatpush2.msra.mxu0 0.0
      %428 = vmatprep.subr.mxu0 0.0
      %429 = vmatpush2.msra.mxu0 0.0
      %430 = vmatprep.subr.mxu0 0.0
      %431 = vmatpush2.msra.mxu0 0.0
      %432 = vmatprep.subr.mxu0 0.0
      %433 = vmatpush2.msra.mxu0 0.0
      %434 = vmatprep.mubr.f32.mxu0 0.0
      %435 = vmatmul.mubr.f32.gmra.mxu0 %v368
      %v436 = vpop.f32.mrf.mxu0
      %v437 = vadd.f32 %v359, %v436
      %v438 = vpop.f32.mrf.mxu0
      %v439 = vadd.f32 %v363, %v438
      %440 = vdwg.mxu0
      %v441 = vmul.f32 %v437, %v437
      %v442 = vmul.f32 %v439, %v439
      %v443 = vld [vmem:[%s3] sm:$0xff]
      %v444 = vld [vmem:[%s3 + $0x8] sm:$0xff]
      %v445 = vld [vmem:[%s3 + $0x10] sm:$0xff]
      %v446 = vld [vmem:[%s3 + $0x18] sm:$0xff]
      %v447 = vld [vmem:[%s3 + $0x20] sm:$0xff]
      %v448 = vld [vmem:[%s3 + $0x28] sm:$0xff]
      %v449 = vld [vmem:[%s3 + $0x30] sm:$0xff]
      %v450 = vld [vmem:[%s3 + $0x38] sm:$0xff]
      %v451 = vld [vmem:[%s3 + $0x40] sm:$0xff]
      %v452 = vld [vmem:[%s3 + $0x48] sm:$0xff]
      %v453 = vld [vmem:[%s3 + $0x50] sm:$0xff]
      %v454 = vld [vmem:[%s3 + $0x58] sm:$0xff]
      %v455 = vld [vmem:[%s3 + $0x60] sm:$0xff]
      %v456 = vld [vmem:[%s3 + $0x68] sm:$0xff]
      %v457 = vld [vmem:[%s3 + $0x70] sm:$0xff]
      %v458 = vld [vmem:[%s3 + $0x78] sm:$0xff]
      %v459 = vld [vmem:[%s3 + $0x80] sm:$0xff]
      %v460 = vld [vmem:[%s3 + $0x88] sm:$0xff]
      %v461 = vld [vmem:[%s3 + $0x90] sm:$0xff]
      %v462 = vld [vmem:[%s3 + $0x98] sm:$0xff]
      %v463 = vld [vmem:[%s3 + $0xa0] sm:$0xff]
      %v464 = vld [vmem:[%s3 + $0xa8] sm:$0xff]
      %v465 = vld [vmem:[%s3 + $0xb0] sm:$0xff]
      %v466 = vld [vmem:[%s3 + $0xb8] sm:$0xff]
      %v467 = vld [vmem:[%s3 + $0xc0] sm:$0xff]
      %v468 = vld [vmem:[%s3 + $0xc8] sm:$0xff]
      %v469 = vld [vmem:[%s3 + $0xd0] sm:$0xff]
      %v470 = vld [vmem:[%s3 + $0xd8] sm:$0xff]
      %v471 = vld [vmem:[%s3 + $0xe0] sm:$0xff]
      %v472 = vld [vmem:[%s3 + $0xe8] sm:$0xff]
      %v473 = vld [vmem:[%s3 + $0xf0] sm:$0xff]
      %v474 = vld [vmem:[%s3 + $0xf8] sm:$0xff]
      %v475 = vld [vmem:[%s3 + $0x100] sm:$0xff]
      %v476 = vld [vmem:[%s3 + $0x108] sm:$0xff]
      %v477 = vld [vmem:[%s3 + $0x110] sm:$0xff]
      %v478 = vld [vmem:[%s3 + $0x118] sm:$0xff]
      %v479 = vld [vmem:[%s3 + $0x120] sm:$0xff]
      %v480 = vld [vmem:[%s3 + $0x128] sm:$0xff]
      %v481 = vld [vmem:[%s3 + $0x130] sm:$0xff]
      %v482 = vld [vmem:[%s3 + $0x138] sm:$0xff]
      %v484 = vsel %vm332, %v442, 0
      %486 = vmatprep.subr.mxu0 %v474
      %487 = vmatpush1.msra.mxu0 %v473
      %488 = vmatprep.subr.mxu0 %v472
      %489 = vmatpush1.msra.mxu0 %v471
      %490 = vmatprep.subr.mxu0 %v470
      %491 = vmatpush1.msra.mxu0 %v469
      %492 = vmatprep.subr.mxu0 %v468
      %493 = vmatpush1.msra.mxu0 %v467
      %494 = vmatprep.subr.mxu0 %v466
      %495 = vmatpush1.msra.mxu0 %v465
      %496 = vmatprep.subr.mxu0 %v464
      %497 = vmatpush1.msra.mxu0 %v463
      %498 = vmatprep.subr.mxu0 %v462
      %499 = vmatpush1.msra.mxu0 %v461
      %500 = vmatprep.subr.mxu0 %v460
      %501 = vmatpush1.msra.mxu0 %v459
      %502 = vmatprep.subr.mxu0 %v458
      %503 = vmatpush1.msra.mxu0 %v457
      %504 = vmatprep.subr.mxu0 %v456
      %505 = vmatpush1.msra.mxu0 %v455
      %506 = vmatprep.subr.mxu0 %v454
      %507 = vmatpush1.msra.mxu0 %v453
      %508 = vmatprep.subr.mxu0 %v452
      %509 = vmatpush1.msra.mxu0 %v451
      %510 = vmatprep.subr.mxu0 %v450
      %511 = vmatpush1.msra.mxu0 %v449
      %512 = vmatprep.subr.mxu0 %v448
      %513 = vmatpush1.msra.mxu0 %v447
      %514 = vmatprep.subr.mxu0 %v446
      %515 = vmatpush1.msra.mxu0 %v445
      %516 = vmatprep.subr.mxu0 %v444
      %517 = vmatpush1.msra.mxu0 %v443
      %518 = vmatprep.subr.mxu0 0.0
      %519 = vmatpush2.msra.mxu0 0.0
      %520 = vmatprep.subr.mxu0 0.0
      %521 = vmatpush2.msra.mxu0 0.0
      %522 = vmatprep.subr.mxu0 0.0
      %523 = vmatpush2.msra.mxu0 0.0
      %524 = vmatprep.subr.mxu0 0.0
      %525 = vmatpush2.msra.mxu0 0.0
      %526 = vmatprep.subr.mxu0 0.0
      %527 = vmatpush2.msra.mxu0 0.0
      %528 = vmatprep.subr.mxu0 0.0
      %529 = vmatpush2.msra.mxu0 0.0
      %530 = vmatprep.subr.mxu0 0.0
      %531 = vmatpush2.msra.mxu0 0.0
      %532 = vmatprep.subr.mxu0 0.0
      %533 = vmatpush2.msra.mxu0 0.0
      %534 = vmatprep.subr.mxu0 0.0
      %535 = vmatpush2.msra.mxu0 0.0
      %536 = vmatprep.subr.mxu0 0.0
      %537 = vmatpush2.msra.mxu0 0.0
      %538 = vmatprep.subr.mxu0 0.0
      %539 = vmatpush2.msra.mxu0 0.0
      %540 = vmatprep.subr.mxu0 0.0
      %541 = vmatpush2.msra.mxu0 0.0
      %542 = vmatprep.subr.mxu0 %v482
      %543 = vmatpush2.msra.mxu0 %v481
      %544 = vmatprep.subr.mxu0 %v480
      %545 = vmatpush2.msra.mxu0 %v479
      %546 = vmatprep.subr.mxu0 %v478
      %547 = vmatpush2.msra.mxu0 %v477
      %548 = vmatprep.subr.mxu0 %v476
      %549 = vmatpush2.msra.mxu0 %v475
      %550 = vmatprep.mubr.f32.mxu0 %v484
      %551 = vmatmul.mubr.f32.gmra.mxu0 %v441
      %v552 = vpop.f32.mrf.mxu0
      %v553 = vadd.f32 1e-05, %v552
      %v554 = vpop.f32.mrf.mxu0
      %v555 = vadd.f32 1e-05, %v554
      %556 = vdwg.mxu0
      %v557 = vrsqrt.pop %v553
      %v558 = vrsqrt.pop %v555
      %v559 = vmul.f32 %v437, %v557
      %v560 = vmul.f32 %v439, %v558
      %v562 = vlaneseq
      %v563 = vshrl.u32 %v562, 7
      %v564 = vsub.s32 0, %v563
      %v565 = vrot.slane %v336, %v564
      %v566 = vlaneseq
      %v567 = vshrl.u32 %v566, 7
      %v568 = vsub.s32 1, %v567
      %v569 = vrot.slane %v336, %v568
      %v572 = vmul.f32 %v559, %v565
      %v573 = vmul.f32 %v560, %v569
      %v575 = vlaneseq
      %v576 = vshrl.u32 %v575, 7
      %v577 = vsub.s32 0, %v576
      %v578 = vrot.slane %v338, %v577
      %v579 = vlaneseq
      %v580 = vshrl.u32 %v579, 7
      %v581 = vsub.s32 1, %v580
      %v582 = vrot.slane %v338, %v581
      %v585 = vadd.f32 %v572, %v578
      %v586 = vadd.f32 %v573, %v582
      %v587 = vmax.f32 %v585, 0.0
      %v588 = vmax.f32 %v586, 0.0
      %v589 = vlaneseq
      %v590 = vand.u32 %v589, 127
      %v591 = vadd.s32 %v590, 128
      %vm592 = vcmp.lt.s32.totalorder %v590, 32
      %vm593 = vcmp.lt.s32.totalorder %v591, 32
      %vm594 = vmand %vm319, %vm592
      %vm595 = vmand %vm319, %vm593
      %v596 = vsel %vm594, 0.0, %v587
      %v597 = vsel %vm595, 0.0, %v588
      %v598 = vld [vmem:[%s7] sm:$0x1]
      %v599 = vld [vmem:[%s7 + $0x1] sm:$0x1]
      %v600 = vld [vmem:[%s7 + $0x2] sm:$0x1]
      %v601 = vld [vmem:[%s4] sm:$0xff]
      %v602 = vld [vmem:[%s4 + $0x8] sm:$0xff]
      %v603 = vld [vmem:[%s4 + $0x10] sm:$0xff]
      %v604 = vld [vmem:[%s4 + $0x18] sm:$0xff]
      %v605 = vld [vmem:[%s4 + $0x20] sm:$0xff]
      %v606 = vld [vmem:[%s4 + $0x28] sm:$0xff]
      %v607 = vld [vmem:[%s4 + $0x30] sm:$0xff]
      %v608 = vld [vmem:[%s4 + $0x38] sm:$0xff]
      %v609 = vld [vmem:[%s4 + $0x40] sm:$0xff]
      %v610 = vld [vmem:[%s4 + $0x48] sm:$0xff]
      %v611 = vld [vmem:[%s4 + $0x50] sm:$0xff]
      %v612 = vld [vmem:[%s4 + $0x58] sm:$0xff]
      %v613 = vld [vmem:[%s4 + $0x60] sm:$0xff]
      %v614 = vld [vmem:[%s4 + $0x68] sm:$0xff]
      %v615 = vld [vmem:[%s4 + $0x70] sm:$0xff]
      %v616 = vld [vmem:[%s4 + $0x78] sm:$0xff]
      %v617 = vld [vmem:[%s4 + $0x80] sm:$0xff]
      %v618 = vld [vmem:[%s4 + $0x88] sm:$0xff]
      %v619 = vld [vmem:[%s4 + $0x90] sm:$0xff]
      %v620 = vld [vmem:[%s4 + $0x98] sm:$0xff]
      %v621 = vlaneseq
      %v622 = vshrl.u32 %v621, 7
      %v623 = vsub.s32 0, %v622
      %v624 = vrot.slane %v598, %v623
      %v626 = vsel %vm332, %v597, 0
      %628 = vmatprep.subr.mxu0 0.0
      %629 = vmatpush1.msra.mxu0 %v616
      %630 = vmatprep.subr.mxu0 0.0
      %631 = vmatpush1.msra.mxu0 %v615
      %632 = vmatprep.subr.mxu0 0.0
      %633 = vmatpush1.msra.mxu0 %v614
      %634 = vmatprep.subr.mxu0 0.0
      %635 = vmatpush1.msra.mxu0 %v613
      %636 = vmatprep.subr.mxu0 0.0
      %637 = vmatpush1.msra.mxu0 %v612
      %638 = vmatprep.subr.mxu0 0.0
      %639 = vmatpush1.msra.mxu0 %v611
      %640 = vmatprep.subr.mxu0 0.0
      %641 = vmatpush1.msra.mxu0 %v610
      %642 = vmatprep.subr.mxu0 0.0
      %643 = vmatpush1.msra.mxu0 %v609
      %644 = vmatprep.subr.mxu0 0.0
      %645 = vmatpush1.msra.mxu0 %v608
      %646 = vmatprep.subr.mxu0 0.0
      %647 = vmatpush1.msra.mxu0 %v607
      %648 = vmatprep.subr.mxu0 0.0
      %649 = vmatpush1.msra.mxu0 %v606
      %650 = vmatprep.subr.mxu0 0.0
      %651 = vmatpush1.msra.mxu0 %v605
      %652 = vmatprep.subr.mxu0 0.0
      %653 = vmatpush1.msra.mxu0 %v604
      %654 = vmatprep.subr.mxu0 0.0
      %655 = vmatpush1.msra.mxu0 %v603
      %656 = vmatprep.subr.mxu0 0.0
      %657 = vmatpush1.msra.mxu0 %v602
      %658 = vmatprep.subr.mxu0 0.0
      %659 = vmatpush1.msra.mxu0 %v601
      %660 = vmatprep.subr.mxu0 0.0
      %661 = vmatpush2.msra.mxu0 0.0
      %662 = vmatprep.subr.mxu0 0.0
      %663 = vmatpush2.msra.mxu0 0.0
      %664 = vmatprep.subr.mxu0 0.0
      %665 = vmatpush2.msra.mxu0 0.0
      %666 = vmatprep.subr.mxu0 0.0
      %667 = vmatpush2.msra.mxu0 0.0
      %668 = vmatprep.subr.mxu0 0.0
      %669 = vmatpush2.msra.mxu0 0.0
      %670 = vmatprep.subr.mxu0 0.0
      %671 = vmatpush2.msra.mxu0 0.0
      %672 = vmatprep.subr.mxu0 0.0
      %673 = vmatpush2.msra.mxu0 0.0
      %674 = vmatprep.subr.mxu0 0.0
      %675 = vmatpush2.msra.mxu0 0.0
      %676 = vmatprep.subr.mxu0 0.0
      %677 = vmatpush2.msra.mxu0 0.0
      %678 = vmatprep.subr.mxu0 0.0
      %679 = vmatpush2.msra.mxu0 0.0
      %680 = vmatprep.subr.mxu0 0.0
      %681 = vmatpush2.msra.mxu0 0.0
      %682 = vmatprep.subr.mxu0 0.0
      %683 = vmatpush2.msra.mxu0 0.0
      %684 = vmatprep.subr.mxu0 0.0
      %685 = vmatpush2.msra.mxu0 %v620
      %686 = vmatprep.subr.mxu0 0.0
      %687 = vmatpush2.msra.mxu0 %v619
      %688 = vmatprep.subr.mxu0 0.0
      %689 = vmatpush2.msra.mxu0 %v618
      %690 = vmatprep.subr.mxu0 0.0
      %691 = vmatpush2.msra.mxu0 %v617
      %692 = vmatprep.mubr.f32.mxu0 %v626
      %693 = vmatmul.mubr.f32.gmra.mxu0 %v596
      %v694 = vpop.f32.mrf.mxu0
      %v695 = vadd.f32 %v624, %v694
      %v696 = vpop.f32.mrf.mxu0
      %697 = vdwg.mxu0
      %v698 = vmul.f32 %v695, %v695
      %v699 = vld [vmem:[%s5] sm:$0xff]
      %v700 = vld [vmem:[%s5 + $0x8] sm:$0xff]
      %v701 = vld [vmem:[%s5 + $0x10] sm:$0xff]
      %v702 = vld [vmem:[%s5 + $0x18] sm:$0xff]
      %v703 = vld [vmem:[%s5 + $0x20] sm:$0xff]
      %v704 = vld [vmem:[%s5 + $0x28] sm:$0xff]
      %v705 = vld [vmem:[%s5 + $0x30] sm:$0xff]
      %v706 = vld [vmem:[%s5 + $0x38] sm:$0xff]
      %v707 = vld [vmem:[%s5 + $0x40] sm:$0xff]
      %v708 = vld [vmem:[%s5 + $0x48] sm:$0xff]
      %v709 = vld [vmem:[%s5 + $0x50] sm:$0xff]
      %v710 = vld [vmem:[%s5 + $0x58] sm:$0xff]
      %v711 = vld [vmem:[%s5 + $0x60] sm:$0xff]
      %v712 = vld [vmem:[%s5 + $0x68] sm:$0xff]
      %v713 = vld [vmem:[%s5 + $0x70] sm:$0xff]
      %v714 = vld [vmem:[%s5 + $0x78] sm:$0xff]
      %715 = vmatprep.subr.mxu0 0.0
      %716 = vmatpush1.msra.mxu0 %v714
      %717 = vmatprep.subr.mxu0 0.0
      %718 = vmatpush1.msra.mxu0 %v713
      %719 = vmatprep.subr.mxu0 0.0
      %720 = vmatpush1.msra.mxu0 %v712
      %721 = vmatprep.subr.mxu0 0.0
      %722 = vmatpush1.msra.mxu0 %v711
      %723 = vmatprep.subr.mxu0 0.0
      %724 = vmatpush1.msra.mxu0 %v710
      %725 = vmatprep.subr.mxu0 0.0
      %726 = vmatpush1.msra.mxu0 %v709
      %727 = vmatprep.subr.mxu0 0.0
      %728 = vmatpush1.msra.mxu0 %v708
      %729 = vmatprep.subr.mxu0 0.0
      %730 = vmatpush1.msra.mxu0 %v707
      %731 = vmatprep.subr.mxu0 0.0
      %732 = vmatpush1.msra.mxu0 %v706
      %733 = vmatprep.subr.mxu0 0.0
      %734 = vmatpush1.msra.mxu0 %v705
      %735 = vmatprep.subr.mxu0 0.0
      %736 = vmatpush1.msra.mxu0 %v704
      %737 = vmatprep.subr.mxu0 0.0
      %738 = vmatpush1.msra.mxu0 %v703
      %739 = vmatprep.subr.mxu0 0.0
      %740 = vmatpush1.msra.mxu0 %v702
      %741 = vmatprep.subr.mxu0 0.0
      %742 = vmatpush1.msra.mxu0 %v701
      %743 = vmatprep.subr.mxu0 0.0
      %744 = vmatpush1.msra.mxu0 %v700
      %745 = vmatprep.subr.mxu0 0.0
      %746 = vmatpush1.msra.mxu0 %v699
      %747 = vmatprep.subr.mxu0 0.0
      %748 = vmatpush2.msra.mxu0 0.0
      %749 = vmatprep.subr.mxu0 0.0
      %750 = vmatpush2.msra.mxu0 0.0
      %751 = vmatprep.subr.mxu0 0.0
      %752 = vmatpush2.msra.mxu0 0.0
      %753 = vmatprep.subr.mxu0 0.0
      %754 = vmatpush2.msra.mxu0 0.0
      %755 = vmatprep.subr.mxu0 0.0
      %756 = vmatpush2.msra.mxu0 0.0
      %757 = vmatprep.subr.mxu0 0.0
      %758 = vmatpush2.msra.mxu0 0.0
      %759 = vmatprep.subr.mxu0 0.0
      %760 = vmatpush2.msra.mxu0 0.0
      %761 = vmatprep.subr.mxu0 0.0
      %762 = vmatpush2.msra.mxu0 0.0
      %763 = vmatprep.subr.mxu0 0.0
      %764 = vmatpush2.msra.mxu0 0.0
      %765 = vmatprep.subr.mxu0 0.0
      %766 = vmatpush2.msra.mxu0 0.0
      %767 = vmatprep.subr.mxu0 0.0
      %768 = vmatpush2.msra.mxu0 0.0
      %769 = vmatprep.subr.mxu0 0.0
      %770 = vmatpush2.msra.mxu0 0.0
      %771 = vmatprep.subr.mxu0 0.0
      %772 = vmatpush2.msra.mxu0 0.0
      %773 = vmatprep.subr.mxu0 0.0
      %774 = vmatpush2.msra.mxu0 0.0
      %775 = vmatprep.subr.mxu0 0.0
      %776 = vmatpush2.msra.mxu0 0.0
      %777 = vmatprep.subr.mxu0 0.0
      %778 = vmatpush2.msra.mxu0 0.0
      %779 = vmatprep.mubr.f32.mxu0 0.0
      %780 = vmatmul.mubr.f32.gmra.mxu0 %v698
      %v781 = vpop.f32.mrf.mxu0
      %v782 = vadd.f32 1e-05, %v781
      %v783 = vpop.f32.mrf.mxu0
      %784 = vdwg.mxu0
      %v785 = vrsqrt.pop %v782
      %v786 = vmul.f32 %v695, %v785
      %v787 = vlaneseq
      %v788 = vshrl.u32 %v787, 7
      %v789 = vsub.s32 0, %v788
      %v790 = vrot.slane %v599, %v789
      %v791 = vmul.f32 %v786, %v790
      %v792 = vlaneseq
      %v793 = vshrl.u32 %v792, 7
      %v794 = vsub.s32 0, %v793
      %v795 = vrot.slane %v600, %v794
      %v796 = vadd.f32 %v791, %v795
      %v797 = vmax.f32 %v796, 0.0
      %798 = vst [vmem:[%s314] sm:$0xff] %v797
      %p799 = scmp.lt.s32.totalorder %s19, 1
      %s800 = scalar_select %p799, %s19, 1
      %s801 = smul.addr %s800, 8
      %s802 = scalar_lea.vmem %s8, %s801
      // Predicated region
      $region53: #{_lambda_.1} parent=51 // pred_check
        %p803 = pneg %p215
      $region54: #{_lambda_.1} parent=51 // pred_check_branch
        %805 = sbr.rel (%p803) target = $region56
      $region55: #{_lambda_.1} parent=51 // pred_region
        _
      $region56: #{_lambda_.1} parent=51 // pred_fallthru
        _
    $region52: #{_lambda_.1} parent=5 // pred_fallthru
      _
    %p806 = scmp.le.s32.totalorder 2, %s14
    // Predicated region
    $region57: #{_lambda_.1} parent=5 // pred_check
      %p807 = pneg %p806
    $region58: #{_lambda_.1} parent=5 // pred_check_branch
      %809 = sbr.rel (%p807) target = $region60
    $region59: #{_lambda_.1} parent=5 // pred_region
      %s810 = ssub.s32 %s14, 2
      // Predicated region
      $region61: #{_lambda_.1} parent=59 // pred_check
        %p811 = pneg %p221
      $region62: #{_lambda_.1} parent=59 // pred_check_branch
        %813 = sbr.rel (%p811) target = $region64
      $region63: #{_lambda_.1} parent=59 // pred_region
        %p814 = scmp.lt.s32.totalorder %s20, 1
        %s815 = scalar_select %p814, %s20, 1
        %s816 = smul.addr %s815, 8
        %s817 = scalar_lea.vmem %s8, %s816
      $region64: #{_lambda_.1} parent=59 // pred_fallthru
        _
    $region60: #{_lambda_.1} parent=5 // pred_fallthru
      _
  $region6: #{_lambda_.1} parent=0 // loop_footer
    %s18 = sadd.s32 1, %s14
  $region7: #{_lambda_.1} parent=0 // loop_footer_branch
    %13 = sbr.rel target = $region3
  $region8: #{_lambda_.1} parent=0 // loop_exit
    _

</llo_original>
